<compile_context>
chip_gen: v7x
topology: tpu7x:2x2x1
jax: 0.10.0
libtpu: 0.0.40
codegen_flags: <defaults>
</compile_context>

<pallas_src>
import functools
import math

import jax
import jax.numpy as jnp
from jax import lax
from jax.experimental import pallas as pl
from jax.experimental.pallas import tpu as pltpu

EPS = 1e-6
CHUNK = 8


def make_dct(n_mfcc: int, n_mels: int) -> jnp.ndarray:
    """torchaudio.functional.create_dct(n_mfcc, n_mels, norm='ortho') in JAX."""
    n = jnp.arange(n_mels, dtype=jnp.float32)[:, None]        # (n_mels, 1)
    k = jnp.arange(n_mfcc, dtype=jnp.float32)[None, :]        # (1, n_mfcc)
    dct = jnp.cos(jnp.pi / n_mels * (n + 0.5) * k)            # (n_mels, n_mfcc)
    scale = jnp.where(k == 0, jnp.sqrt(1.0 / n_mels), jnp.sqrt(2.0 / n_mels))
    return (dct * scale).astype(jnp.float32)


def _round_up(v: int, m: int) -> int:
    return -(-v // m) * m


def _spcen_cc_kernel(x_ref, p_ref, dct_ref, o_ref, pcen_ref, *, chunk: int):
    """One lane-group per grid step.

    x_ref    : (T, W)   W = b_lane * n_mels (batch rows packed along lanes)
    p_ref    : (6, W)   rows = [s, 1-s, -alpha, delta, r, delta**r]
    dct_ref  : (W, CC_W) block-diagonal, drop_first-folded, zero-padded DCT
    o_ref    : (T, CC_W)
    pcen_ref : (T, W)   VMEM scratch holding the PCEN-transformed block
    """
    T, W = x_ref.shape
    num_chunks = T // chunk

    s = p_ref[0:1, :]                                   # (1, W)
    one_m_s = p_ref[1:2, :]                             # (1, W)
    # Hoisted full-chunk broadcasts (JAX does not CSE broadcast_in_dim).
    neg_alpha = jnp.broadcast_to(p_ref[2:3, :], (chunk, W))
    delta = jnp.broadcast_to(p_ref[3:4, :], (chunk, W))
    r = jnp.broadcast_to(p_ref[4:5, :], (chunk, W))
    delta_r = jnp.broadcast_to(p_ref[5:6, :], (chunk, W))

    def chunk_body(c, m_prev):
        t0 = pl.multiple_of(c * chunk, chunk)
        m = m_prev
        e_rows, m_rows = [], []
        for i in range(chunk):                          # unrolled serial IIR
            e_i = x_ref[pl.ds(t0 + i, 1), :]            # (1, W) row load
            m = one_m_s * m + s * e_i
            e_rows.append(e_i)
            m_rows.append(m)
        e_chunk = jnp.concatenate(e_rows, axis=0)       # (chunk, W)
        m_chunk = jnp.concatenate(m_rows, axis=0)       # (chunk, W)
        # PCEN on a full (chunk, W) slab: E * (eps+M)^(-alpha) avoids a divide,
        # delta**r was precomputed in the wrapper.
        pcen = jnp.power(e_chunk * jnp.power(EPS + m_chunk, neg_alpha) + delta,
                         r) - delta_r
        pcen_ref[pl.ds(t0, chunk), :] = pcen            # one slab store / chunk
        return m

    m_init = x_ref[pl.ds(0, 1), :]      # seed so that M[0] == E[0]
    lax.fori_loop(0, num_chunks, chunk_body, m_init,
                  unroll=min(4, num_chunks))

    # One MXU pass for the whole block: (T, W) @ (W, CC_W), lane-dense output.
    o_ref[...] = jnp.dot(pcen_ref[...], dct_ref[...],
                         preferred_element_type=jnp.float32)


def spcen_cc_forward(x, s, alpha, delta, r, dct, *, drop_first: bool = True,
                     chunk: int = CHUNK):
    """x: (B, T, n_mels) float32  ->  (B, T, n_cc - drop_first) float32."""
    B, T, n_mels = x.shape
    assert dct.shape[0] == n_mels
    dct_used = dct[:, 1:] if drop_first else dct        # fold drop_first here
    out_cc = dct_used.shape[1]

    # Lane packing: how many batch rows share the 128-lane axis of one block.
    b_lane = max(1, 128 // n_mels)
    if (b_lane * n_mels) % 128 != 0:
        b_lane = max(B, 1)      # fallback: single group -> block == full array

    g = max(1, -(-B // b_lane))             # number of lane groups = grid size
    B_pad = g * b_lane
    T_pad = _round_up(max(T, 1), chunk)
    W = b_lane * n_mels

    # (B, T, n_mels) -> (T_pad, B_pad * n_mels), lane-group-major layout.
    xp = jnp.pad(x.astype(jnp.float32),
                 ((0, B_pad - B), (0, T_pad - T), (0, 0)))
    x2d = jnp.transpose(xp, (1, 0, 2)).reshape(T_pad, B_pad * n_mels)

    # Merged per-channel parameters: [s, 1-s, -alpha, delta, r, delta**r].
    def _row(v):
        return jnp.asarray(v, jnp.float32).reshape(1, n_mels)
    s_, a_, d_, r_ = _row(s), _row(alpha), _row(delta), _row(r)
    params = jnp.concatenate([s_, 1.0 - s_, -a_, d_, r_, d_ ** r_], axis=0)
    params = jnp.tile(params, (1, b_lane))                       # (6, W)

    # Block-diagonal DCT, zero-padded per batch slot so CC_W % 128 == 0
    # (fully lane-dense output stores); padding is sliced away in the wrapper.
    unit = 128 // math.gcd(128, b_lane)
    cc_pad = _round_up(out_cc, unit)
    dct_p = jnp.zeros((n_mels, cc_pad), jnp.float32).at[:, :out_cc].set(
        dct_used.astype(jnp.float32))
    dct_big = jnp.kron(jnp.eye(b_lane, dtype=jnp.float32), dct_p)  # (W, CC_W)
    CC_W = b_lane * cc_pad

    kernel = functools.partial(_spcen_cc_kernel, chunk=chunk)
    out2d = pl.pallas_call(
        kernel,
        out_shape=jax.ShapeDtypeStruct((T_pad, g * CC_W), jnp.float32),
        grid_spec=pltpu.PrefetchScalarGridSpec(
            num_scalar_prefetch=0,
            grid=(g,),
            in_specs=[
                pl.BlockSpec((T_pad, W), lambda i: (0, i)),     # x lane-group
                pl.BlockSpec((6, W), lambda i: (0, 0)),         # packed params
                pl.BlockSpec((W, CC_W), lambda i: (0, 0)),      # block-diag DCT
            ],
            out_specs=pl.BlockSpec((T_pad, CC_W), lambda i: (0, i)),
            scratch_shapes=[pltpu.VMEM((T_pad, W), jnp.float32)],
        ),
        compiler_params=pltpu.CompilerParams(
            dimension_semantics=("parallel",),
            vmem_limit_bytes=32 * 1024 * 1024,
        ),
    )(x2d, params, dct_big)

    # (T_pad, g*CC_W) -> (B, T, out_cc): undo lane packing + padding.
    out = out2d.reshape(T_pad, g, b_lane, cc_pad)
    out = jnp.transpose(out, (1, 2, 0, 3)).reshape(B_pad, T_pad, cc_pad)
    return out[:B, :T, :out_cc]


def spcen_cc_reference(x, s, alpha, delta, r, dct, drop_first=True):
    """Pure-JAX reference of the assumed module semantics."""
    s_ = s.reshape(1, -1)
    a_ = alpha.reshape(1, -1)
    d_ = delta.reshape(1, -1)
    r_ = r.reshape(1, -1)
    _, T, _ = x.shape
    m = x[:, 0, :]
    Ms = []
    for t in range(T):
        m = (1.0 - s_) * m + s_ * x[:, t, :]
        Ms.append(m)
    M = jnp.stack(Ms, axis=1)                               # (B, T, n_mels)
    pcen = (x / (EPS + M) ** a_ + d_) ** r_ - d_ ** r_
    out = jnp.einsum('btm,mc->btc', pcen, dct, precision='highest')
    return out[..., 1:] if drop_first else out


if __name__ == "__main__":
    # Small shapes consistent with the module defaults: n_mels=64, n_cc=20.
    B, T, N_MELS, N_CC = 2, 16, 64, 20

    key = jax.random.PRNGKey(0)
    # Non-negative mel-energy-like input.
    x = jax.random.uniform(key, (B, T, N_MELS), dtype=jnp.float32,
                           minval=0.0, maxval=10.0)

    # Trainable parameters at module-default initialization.
    s = jnp.full((N_MELS,), 1e-4, dtype=jnp.float32)
    alpha = jnp.full((N_MELS,), 0.98, dtype=jnp.float32)
    delta = jnp.full((N_MELS,), 2.0, dtype=jnp.float32)
    r = jnp.full((N_MELS,), 0.2, dtype=jnp.float32)
    dct = make_dct(N_CC, N_MELS)                            # (n_mels, n_cc)

    out = spcen_cc_forward(x, s, alpha, delta, r, dct, drop_first=True)
    out = jax.block_until_ready(out)
    assert out.shape == (B, T, N_CC - 1), out.shape
    assert bool(jnp.all(jnp.isfinite(out)))

    ref = spcen_cc_reference(x, s, alpha, delta, r, dct, drop_first=True)
    max_err = float(jnp.max(jnp.abs(out - ref)))
    assert bool(jnp.allclose(out, ref, rtol=2e-2, atol=2e-2)), max_err

    print("KERNEL_OK")
</pallas_src>

<mosaic_0001>
module attributes {stable_mosaic.version = 11 : i64} {
  func.func @_spcen_cc_kernel(%arg0: i32, %arg1: memref<16x128xf32, #tpu.memory_space<vmem>>, %arg2: memref<6x128xf32, #tpu.memory_space<vmem>>, %arg3: memref<128x128xf32, #tpu.memory_space<vmem>>, %arg4: memref<16x128xf32, #tpu.memory_space<vmem>>, %arg5: memref<16x128xf32, #tpu.memory_space<vmem>>) attributes {dimension_semantics = [#tpu.dimension_semantics<parallel>], iteration_bounds = array<i64: 1>, scalar_prefetch = 0 : i64, scratch_operands = 1 : i64, tpu.core_type = #tpu.core_type<tc>, window_params = [{transform_indices = @transform_0, window_bounds = array<i64: 16, 128>}, {pipeline_mode = #tpu.pipeline_mode<synchronous>, transform_indices = @transform_1, window_bounds = array<i64: 6, 128>}, {pipeline_mode = #tpu.pipeline_mode<synchronous>, transform_indices = @transform_2, window_bounds = array<i64: 128, 128>}, {transform_indices = @transform_3, window_bounds = array<i64: 16, 128>}]} {
    %c0 = arith.constant 0 : index
    %c0_0 = arith.constant 0 : index
    %0 = vector.load %arg2[%c0, %c0_0] : memref<6x128xf32, #tpu.memory_space<vmem>>, vector<1x128xf32>
    %c1 = arith.constant 1 : index
    %c0_1 = arith.constant 0 : index
    %1 = vector.load %arg2[%c1, %c0_1] : memref<6x128xf32, #tpu.memory_space<vmem>>, vector<1x128xf32>
    %c2 = arith.constant 2 : index
    %c0_2 = arith.constant 0 : index
    %2 = vector.load %arg2[%c2, %c0_2] : memref<6x128xf32, #tpu.memory_space<vmem>>, vector<1x128xf32>
    %3 = vector.shape_cast %2 : vector<1x128xf32> to vector<1x128xf32>
    %4 = vector.broadcast %3 : vector<1x128xf32> to vector<8x128xf32>
    %c3 = arith.constant 3 : index
    %c0_3 = arith.constant 0 : index
    %5 = vector.load %arg2[%c3, %c0_3] : memref<6x128xf32, #tpu.memory_space<vmem>>, vector<1x128xf32>
    %6 = vector.shape_cast %5 : vector<1x128xf32> to vector<1x128xf32>
    %7 = vector.broadcast %6 : vector<1x128xf32> to vector<8x128xf32>
    %c4 = arith.constant 4 : index
    %c0_4 = arith.constant 0 : index
    %8 = vector.load %arg2[%c4, %c0_4] : memref<6x128xf32, #tpu.memory_space<vmem>>, vector<1x128xf32>
    %9 = vector.shape_cast %8 : vector<1x128xf32> to vector<1x128xf32>
    %10 = vector.broadcast %9 : vector<1x128xf32> to vector<8x128xf32>
    %c5 = arith.constant 5 : index
    %c0_5 = arith.constant 0 : index
    %11 = vector.load %arg2[%c5, %c0_5] : memref<6x128xf32, #tpu.memory_space<vmem>>, vector<1x128xf32>
    %12 = vector.shape_cast %11 : vector<1x128xf32> to vector<1x128xf32>
    %13 = vector.broadcast %12 : vector<1x128xf32> to vector<8x128xf32>
    %c0_6 = arith.constant 0 : index
    %c0_7 = arith.constant 0 : index
    %14 = vector.load %arg1[%c0_6, %c0_7] : memref<16x128xf32, #tpu.memory_space<vmem>>, vector<1x128xf32>
    %c0_i32 = arith.constant 0 : i32
    %c8_i32 = arith.constant 8 : i32
    %15 = arith.muli %c0_i32, %c8_i32 : i32
    %16 = tpu.assume_multiple %15, 8 : i32
    %c0_i32_8 = arith.constant 0 : i32
    %17 = arith.addi %16, %c0_i32_8 : i32
    %18 = arith.index_cast %17 : i32 to index
    %c0_9 = arith.constant 0 : index
    %19 = vector.load %arg1[%18, %c0_9] : memref<16x128xf32, #tpu.memory_space<vmem>>, vector<1x128xf32>
    %20 = arith.mulf %1, %14 : vector<1x128xf32>
    %21 = arith.mulf %0, %19 : vector<1x128xf32>
    %22 = arith.addf %20, %21 : vector<1x128xf32>
    %c1_i32 = arith.constant 1 : i32
    %23 = arith.addi %16, %c1_i32 : i32
    %24 = arith.index_cast %23 : i32 to index
    %c0_10 = arith.constant 0 : index
    %25 = vector.load %arg1[%24, %c0_10] : memref<16x128xf32, #tpu.memory_space<vmem>>, vector<1x128xf32>
    %26 = arith.mulf %1, %22 : vector<1x128xf32>
    %27 = arith.mulf %0, %25 : vector<1x128xf32>
    %28 = arith.addf %26, %27 : vector<1x128xf32>
    %c2_i32 = arith.constant 2 : i32
    %29 = arith.addi %16, %c2_i32 : i32
    %30 = arith.index_cast %29 : i32 to index
    %c0_11 = arith.constant 0 : index
    %31 = vector.load %arg1[%30, %c0_11] : memref<16x128xf32, #tpu.memory_space<vmem>>, vector<1x128xf32>
    %32 = arith.mulf %1, %28 : vector<1x128xf32>
    %33 = arith.mulf %0, %31 : vector<1x128xf32>
    %34 = arith.addf %32, %33 : vector<1x128xf32>
    %c3_i32 = arith.constant 3 : i32
    %35 = arith.addi %16, %c3_i32 : i32
    %36 = arith.index_cast %35 : i32 to index
    %c0_12 = arith.constant 0 : index
    %37 = vector.load %arg1[%36, %c0_12] : memref<16x128xf32, #tpu.memory_space<vmem>>, vector<1x128xf32>
    %38 = arith.mulf %1, %34 : vector<1x128xf32>
    %39 = arith.mulf %0, %37 : vector<1x128xf32>
    %40 = arith.addf %38, %39 : vector<1x128xf32>
    %c4_i32 = arith.constant 4 : i32
    %41 = arith.addi %16, %c4_i32 : i32
    %42 = arith.index_cast %41 : i32 to index
    %c0_13 = arith.constant 0 : index
    %43 = vector.load %arg1[%42, %c0_13] : memref<16x128xf32, #tpu.memory_space<vmem>>, vector<1x128xf32>
    %44 = arith.mulf %1, %40 : vector<1x128xf32>
    %45 = arith.mulf %0, %43 : vector<1x128xf32>
    %46 = arith.addf %44, %45 : vector<1x128xf32>
    %c5_i32 = arith.constant 5 : i32
    %47 = arith.addi %16, %c5_i32 : i32
    %48 = arith.index_cast %47 : i32 to index
    %c0_14 = arith.constant 0 : index
    %49 = vector.load %arg1[%48, %c0_14] : memref<16x128xf32, #tpu.memory_space<vmem>>, vector<1x128xf32>
    %50 = arith.mulf %1, %46 : vector<1x128xf32>
    %51 = arith.mulf %0, %49 : vector<1x128xf32>
    %52 = arith.addf %50, %51 : vector<1x128xf32>
    %c6_i32 = arith.constant 6 : i32
    %53 = arith.addi %16, %c6_i32 : i32
    %54 = arith.index_cast %53 : i32 to index
    %c0_15 = arith.constant 0 : index
    %55 = vector.load %arg1[%54, %c0_15] : memref<16x128xf32, #tpu.memory_space<vmem>>, vector<1x128xf32>
    %56 = arith.mulf %1, %52 : vector<1x128xf32>
    %57 = arith.mulf %0, %55 : vector<1x128xf32>
    %58 = arith.addf %56, %57 : vector<1x128xf32>
    %c7_i32 = arith.constant 7 : i32
    %59 = arith.addi %16, %c7_i32 : i32
    %60 = arith.index_cast %59 : i32 to index
    %c0_16 = arith.constant 0 : index
    %61 = vector.load %arg1[%60, %c0_16] : memref<16x128xf32, #tpu.memory_space<vmem>>, vector<1x128xf32>
    %62 = arith.mulf %1, %58 : vector<1x128xf32>
    %63 = arith.mulf %0, %61 : vector<1x128xf32>
    %64 = arith.addf %62, %63 : vector<1x128xf32>
    %65 = tpu.concatenate %19, %25, %31, %37, %43, %49, %55, %61 in 0 : vector<1x128xf32>, vector<1x128xf32>, vector<1x128xf32>, vector<1x128xf32>, vector<1x128xf32>, vector<1x128xf32>, vector<1x128xf32>, vector<1x128xf32> -> vector<8x128xf32>
    %66 = tpu.concatenate %22, %28, %34, %40, %46, %52, %58, %64 in 0 : vector<1x128xf32>, vector<1x128xf32>, vector<1x128xf32>, vector<1x128xf32>, vector<1x128xf32>, vector<1x128xf32>, vector<1x128xf32>, vector<1x128xf32> -> vector<8x128xf32>
    %cst = arith.constant 9.99999997E-7 : f32
    %67 = vector.broadcast %cst : f32 to vector<8x128xf32>
    %68 = arith.addf %67, %66 : vector<8x128xf32>
    %69 = math.powf %68, %4 : vector<8x128xf32>
    %70 = arith.mulf %65, %69 : vector<8x128xf32>
    %71 = arith.addf %70, %7 : vector<8x128xf32>
    %72 = math.powf %71, %10 : vector<8x128xf32>
    %73 = arith.subf %72, %13 : vector<8x128xf32>
    %74 = arith.index_cast %16 : i32 to index
    %c0_17 = arith.constant 0 : index
    %75 = vector.load %arg5[%74, %c0_17] : memref<16x128xf32, #tpu.memory_space<vmem>>, vector<8x128xf32>
    tpu.vector_store %arg5[%74, %c0_17], %73 {strides = array<i32>} : memref<16x128xf32, #tpu.memory_space<vmem>>, vector<8x128xf32>,
    %c1_i32_18 = arith.constant 1 : i32
    %c8_i32_19 = arith.constant 8 : i32
    %76 = arith.muli %c1_i32_18, %c8_i32_19 : i32
    %77 = tpu.assume_multiple %76, 8 : i32
    %c0_i32_20 = arith.constant 0 : i32
    %78 = arith.addi %77, %c0_i32_20 : i32
    %79 = arith.index_cast %78 : i32 to index
    %c0_21 = arith.constant 0 : index
    %80 = vector.load %arg1[%79, %c0_21] : memref<16x128xf32, #tpu.memory_space<vmem>>, vector<1x128xf32>
    %81 = arith.mulf %1, %64 : vector<1x128xf32>
    %82 = arith.mulf %0, %80 : vector<1x128xf32>
    %83 = arith.addf %81, %82 : vector<1x128xf32>
    %c1_i32_22 = arith.constant 1 : i32
    %84 = arith.addi %77, %c1_i32_22 : i32
    %85 = arith.index_cast %84 : i32 to index
    %c0_23 = arith.constant 0 : index
    %86 = vector.load %arg1[%85, %c0_23] : memref<16x128xf32, #tpu.memory_space<vmem>>, vector<1x128xf32>
    %87 = arith.mulf %1, %83 : vector<1x128xf32>
    %88 = arith.mulf %0, %86 : vector<1x128xf32>
    %89 = arith.addf %87, %88 : vector<1x128xf32>
    %c2_i32_24 = arith.constant 2 : i32
    %90 = arith.addi %77, %c2_i32_24 : i32
    %91 = arith.index_cast %90 : i32 to index
    %c0_25 = arith.constant 0 : index
    %92 = vector.load %arg1[%91, %c0_25] : memref<16x128xf32, #tpu.memory_space<vmem>>, vector<1x128xf32>
    %93 = arith.mulf %1, %89 : vector<1x128xf32>
    %94 = arith.mulf %0, %92 : vector<1x128xf32>
    %95 = arith.addf %93, %94 : vector<1x128xf32>
    %c3_i32_26 = arith.constant 3 : i32
    %96 = arith.addi %77, %c3_i32_26 : i32
    %97 = arith.index_cast %96 : i32 to index
    %c0_27 = arith.constant 0 : index
    %98 = vector.load %arg1[%97, %c0_27] : memref<16x128xf32, #tpu.memory_space<vmem>>, vector<1x128xf32>
    %99 = arith.mulf %1, %95 : vector<1x128xf32>
    %100 = arith.mulf %0, %98 : vector<1x128xf32>
    %101 = arith.addf %99, %100 : vector<1x128xf32>
    %c4_i32_28 = arith.constant 4 : i32
    %102 = arith.addi %77, %c4_i32_28 : i32
    %103 = arith.index_cast %102 : i32 to index
    %c0_29 = arith.constant 0 : index
    %104 = vector.load %arg1[%103, %c0_29] : memref<16x128xf32, #tpu.memory_space<vmem>>, vector<1x128xf32>
    %105 = arith.mulf %1, %101 : vector<1x128xf32>
    %106 = arith.mulf %0, %104 : vector<1x128xf32>
    %107 = arith.addf %105, %106 : vector<1x128xf32>
    %c5_i32_30 = arith.constant 5 : i32
    %108 = arith.addi %77, %c5_i32_30 : i32
    %109 = arith.index_cast %108 : i32 to index
    %c0_31 = arith.constant 0 : index
    %110 = vector.load %arg1[%109, %c0_31] : memref<16x128xf32, #tpu.memory_space<vmem>>, vector<1x128xf32>
    %111 = arith.mulf %1, %107 : vector<1x128xf32>
    %112 = arith.mulf %0, %110 : vector<1x128xf32>
    %113 = arith.addf %111, %112 : vector<1x128xf32>
    %c6_i32_32 = arith.constant 6 : i32
    %114 = arith.addi %77, %c6_i32_32 : i32
    %115 = arith.index_cast %114 : i32 to index
    %c0_33 = arith.constant 0 : index
    %116 = vector.load %arg1[%115, %c0_33] : memref<16x128xf32, #tpu.memory_space<vmem>>, vector<1x128xf32>
    %117 = arith.mulf %1, %113 : vector<1x128xf32>
    %118 = arith.mulf %0, %116 : vector<1x128xf32>
    %119 = arith.addf %117, %118 : vector<1x128xf32>
    %c7_i32_34 = arith.constant 7 : i32
    %120 = arith.addi %77, %c7_i32_34 : i32
    %121 = arith.index_cast %120 : i32 to index
    %c0_35 = arith.constant 0 : index
    %122 = vector.load %arg1[%121, %c0_35] : memref<16x128xf32, #tpu.memory_space<vmem>>, vector<1x128xf32>
    %123 = arith.mulf %1, %119 : vector<1x128xf32>
    %124 = arith.mulf %0, %122 : vector<1x128xf32>
    %125 = arith.addf %123, %124 : vector<1x128xf32>
    %126 = tpu.concatenate %80, %86, %92, %98, %104, %110, %116, %122 in 0 : vector<1x128xf32>, vector<1x128xf32>, vector<1x128xf32>, vector<1x128xf32>, vector<1x128xf32>, vector<1x128xf32>, vector<1x128xf32>, vector<1x128xf32> -> vector<8x128xf32>
    %127 = tpu.concatenate %83, %89, %95, %101, %107, %113, %119, %125 in 0 : vector<1x128xf32>, vector<1x128xf32>, vector<1x128xf32>, vector<1x128xf32>, vector<1x128xf32>, vector<1x128xf32>, vector<1x128xf32>, vector<1x128xf32> -> vector<8x128xf32>
    %cst_36 = arith.constant 9.99999997E-7 : f32
    %128 = vector.broadcast %cst_36 : f32 to vector<8x128xf32>
    %129 = arith.addf %128, %127 : vector<8x128xf32>
    %130 = math.powf %129, %4 : vector<8x128xf32>
    %131 = arith.mulf %126, %130 : vector<8x128xf32>
    %132 = arith.addf %131, %7 : vector<8x128xf32>
    %133 = math.powf %132, %10 : vector<8x128xf32>
    %134 = arith.subf %133, %13 : vector<8x128xf32>
    %135 = arith.index_cast %77 : i32 to index
    %c0_37 = arith.constant 0 : index
    %136 = vector.load %arg5[%135, %c0_37] : memref<16x128xf32, #tpu.memory_space<vmem>>, vector<8x128xf32>
    tpu.vector_store %arg5[%135, %c0_37], %134 {strides = array<i32>} : memref<16x128xf32, #tpu.memory_space<vmem>>, vector<8x128xf32>,
    %c2_i32_38 = arith.constant 2 : i32
    %c0_39 = arith.constant 0 : index
    %c0_40 = arith.constant 0 : index
    %137 = vector.load %arg5[%c0_39, %c0_40] : memref<16x128xf32, #tpu.memory_space<vmem>>, vector<16x128xf32>
    %c0_41 = arith.constant 0 : index
    %c0_42 = arith.constant 0 : index
    %138 = vector.load %arg3[%c0_41, %c0_42] : memref<128x128xf32, #tpu.memory_space<vmem>>, vector<128x128xf32>
    %cst_43 = arith.constant dense<0.000000e+00> : vector<16x128xf32>
    %139 = tpu.matmul %137, %138, %cst_43 {dimension_numbers = #tpu.dot_dimension_numbers<[1], [0], [0], [1], [0, 0, 1, 1], [], []>} : vector<16x128xf32>, vector<128x128xf32>, vector<16x128xf32> -> vector<16x128xf32>
    %c0_44 = arith.constant 0 : index
    %c0_45 = arith.constant 0 : index
    %140 = vector.load %arg4[%c0_44, %c0_45] : memref<16x128xf32, #tpu.memory_space<vmem>>, vector<16x128xf32>
    tpu.vector_store %arg4[%c0_44, %c0_45], %139 {strides = array<i32>} : memref<16x128xf32, #tpu.memory_space<vmem>>, vector<16x128xf32>,
    return
  }
  func.func @transform_0(%arg0: i32) -> (i32, i32) {
    %c0_i32 = arith.constant 0 : i32
    %c0_i32_0 = arith.constant 0 : i32
    return %c0_i32, %arg0 : i32, i32
  }
  func.func @transform_1(%arg0: i32) -> (i32, i32) {
    %c0_i32 = arith.constant 0 : i32
    %c0_i32_0 = arith.constant 0 : i32
    %c0_i32_1 = arith.constant 0 : i32
    return %c0_i32, %c0_i32_0 : i32, i32
  }
  func.func @transform_2(%arg0: i32) -> (i32, i32) {
    %c0_i32 = arith.constant 0 : i32
    %c0_i32_0 = arith.constant 0 : i32
    %c0_i32_1 = arith.constant 0 : i32
    return %c0_i32, %c0_i32_0 : i32, i32
  }
  func.func @transform_3(%arg0: i32) -> (i32, i32) {
    %c0_i32 = arith.constant 0 : i32
    %c0_i32_0 = arith.constant 0 : i32
    return %c0_i32, %arg0 : i32, i32
  }
}

</mosaic_0001>

<llo_original>
// kernel: tpu_custom_call.1
$region0: #{tpu_custom_call.1}
  #allocation0 [shape = 'u32[]', space=smem, size = 0x4, offset = 0x4, fixed_abs, tag = 'smem constant byte address 0x4 - core index']
  #allocation1 [shape = 'u32[144,128]{1,0:T(1,128)}', space=vmem, size = 0x12000, scoped, tag = 'internal scratch']
  #allocation2 [shape = 'f32[16,128]{1,0:T(8,128)}', space=vmem, size = 0x2000, scoped, tag = 'scratch operand']
  %s0 = inlined_call_operand.hbm [shape: f32[16,128], index: 0, kind: input, shape index: {}]
  %s1 = inlined_call_operand.hbm [shape: f32[6,128], index: 1, kind: input, shape index: {}]
  %s2 = inlined_call_operand.hbm [shape: f32[128,128], index: 2, kind: input, shape index: {}]
  %s3 = inlined_call_operand.hbm [shape: f32[16,128], index: 3, kind: output, shape index: {}]
  %s4 = sld [smem:[#allocation0]]
  $region34: #{tpu_custom_call.1} parent=0
    _
  %s6 = ssub.s32 1, %s4
  %s7 = scalar_select 0, %s6, %s4
  $region1: #{tpu_custom_call.1} parent=0
    #allocation3 [shape = 'u8[8192]{0}', space=vmem, size = 0x2000, scoped, tag = 'input window, operand 0, single buffered']
    #allocation4 [shape = 's32[1]{0}', space=sflag, size = 0x4, scoped, tag = 'scoped memory for tpu_custom_call.1']
    #allocation5 [shape = 's32[1]{0}', space=sflag, size = 0x4, scoped, tag = 'scoped memory for tpu_custom_call.1']
    #allocation6 [shape = 'u8[4096]{0}', space=vmem, size = 0x1000, scoped, tag = 'input window, operand 1, single buffered']
    #allocation7 [shape = 's32[1]{0}', space=sflag, size = 0x4, scoped, tag = 'scoped memory for tpu_custom_call.1']
    #allocation8 [shape = 'u8[65536]{0}', space=vmem, size = 0x10000, scoped, tag = 'input window, operand 2, single buffered']
    #allocation9 [shape = 'u8[8192]{0}', space=vmem, size = 0x2000, scoped, tag = 'output window, operand 0, single buffered']
    %8 = vsyncpa [#allocation4], 0
    %9 = vsyncpa [#allocation7], 0
    %10 = vsyncpa [#allocation5], 0
    // Predicated region
    $region2: #{tpu_custom_call.1} parent=1 // pred_check
      _
    $region3: #{tpu_custom_call.1} parent=1 // pred_check_branch
      %12 = sbr.rel (0) target = $region5
    $region4: #{tpu_custom_call.1} parent=1 // pred_region
      %s14 = ssub.s32 256, 256
      %15 = vsyncadd [#allocation4], %s14
      %s16 = sshll.u32 [#allocation3], 4
      %s17 = int_to_ptr.vmem [resolvable:$true] %s16
      %22 = dma.hbm_to_vmem [thread:$0]  %s0, 256, %s17, [#allocation4], 128, 128, 8
    $region5: #{tpu_custom_call.1} parent=1 // pred_fallthru
      _
    // Predicated region
    $region6: #{tpu_custom_call.1} parent=1 // pred_check
      _
    $region7: #{tpu_custom_call.1} parent=1 // pred_check_branch
      %24 = sbr.rel (0) target = $region9
    $region8: #{tpu_custom_call.1} parent=1 // pred_region
      %s26 = ssub.s32 128, 128
      %27 = vsyncadd [#allocation7], %s26
      %s29 = sshll.u32 [#allocation6], 4
      %s30 = int_to_ptr.vmem [resolvable:$true] %s29
      %32 = dma.hbm_to_vmem [thread:$0]  %s1, 128, %s30, [#allocation7]
    $region9: #{tpu_custom_call.1} parent=1 // pred_fallthru
      _
    // Predicated region
    $region10: #{tpu_custom_call.1} parent=1 // pred_check
      _
    $region11: #{tpu_custom_call.1} parent=1 // pred_check_branch
      %34 = sbr.rel (0) target = $region13
    $region12: #{tpu_custom_call.1} parent=1 // pred_region
      %s36 = ssub.s32 2048, 2048
      %37 = vsyncadd [#allocation7], %s36
      %s38 = sshll.u32 [#allocation8], 4
      %s39 = int_to_ptr.vmem [resolvable:$true] %s38
      %44 = dma.hbm_to_vmem [thread:$0]  %s2, 2048, %s39, [#allocation7], 128, 128, 8
    $region13: #{tpu_custom_call.1} parent=1 // pred_fallthru
      _
    // Predicated region
    $region14: #{tpu_custom_call.1} parent=1 // pred_check
      _
    $region15: #{tpu_custom_call.1} parent=1 // pred_check_branch
      %46 = sbr.rel (0) target = $region17
    $region16: #{tpu_custom_call.1} parent=1 // pred_region
      %47 = dma.done [#allocation4], 256
    $region17: #{tpu_custom_call.1} parent=1 // pred_fallthru
      _
    // Predicated region
    $region18: #{tpu_custom_call.1} parent=1 // pred_check
      _
    $region19: #{tpu_custom_call.1} parent=1 // pred_check_branch
      %49 = sbr.rel (0) target = $region21
    $region20: #{tpu_custom_call.1} parent=1 // pred_region
      %50 = dma.done [#allocation7], 128
    $region21: #{tpu_custom_call.1} parent=1 // pred_fallthru
      _
    // Predicated region
    $region22: #{tpu_custom_call.1} parent=1 // pred_check
      _
    $region23: #{tpu_custom_call.1} parent=1 // pred_check_branch
      %52 = sbr.rel (0) target = $region25
    $region24: #{tpu_custom_call.1} parent=1 // pred_region
      %53 = dma.done [#allocation7], 2048
    $region25: #{tpu_custom_call.1} parent=1 // pred_fallthru
      _
    %v54 = vld [vmem:[#allocation6] sm:$0x1]
    %v55 = vld [vmem:[#allocation6 + $0x1] sm:$0x1]
    %v56 = vld [vmem:[#allocation6 + $0x2] sm:$0x1]
    %v57 = vlaneseq
    %v58 = vshrl.u32 %v57, 7
    %v59 = vsub.s32 0, %v58
    %v60 = vrot.slane %v56, %v59
    %v61 = vld [vmem:[#allocation6 + $0x3] sm:$0x1]
    %v62 = vlaneseq
    %v63 = vshrl.u32 %v62, 7
    %v64 = vsub.s32 0, %v63
    %v65 = vrot.slane %v61, %v64
    %v66 = vld [vmem:[#allocation6 + $0x4] sm:$0x1]
    %v67 = vlaneseq
    %v68 = vshrl.u32 %v67, 7
    %v69 = vsub.s32 0, %v68
    %v70 = vrot.slane %v66, %v69
    %v71 = vld [vmem:[#allocation6 + $0x5] sm:$0x1]
    %v72 = vlaneseq
    %v73 = vshrl.u32 %v72, 7
    %v74 = vsub.s32 0, %v73
    %v75 = vrot.slane %v71, %v74
    %v76 = vld [vmem:[#allocation3] sm:$0x1]
    %v77 = vld [vmem:[#allocation3] sm:$0x1]
    %v78 = vmul.f32 %v55, %v76
    %v79 = vmul.f32 %v54, %v77
    %v80 = vadd.f32 %v78, %v79
    %s81 = sadd.s32 0, 1
    %s82 = scalar_lea.vmem [#allocation3], %s81
    %v83 = vld [vmem:[%s82] sm:$0x1]
    %v84 = vmul.f32 %v55, %v80
    %v85 = vmul.f32 %v54, %v83
    %v86 = vadd.f32 %v84, %v85
    %s87 = sadd.s32 0, 2
    %s88 = scalar_lea.vmem [#allocation3], %s87
    %v89 = vld [vmem:[%s88] sm:$0x1]
    %v90 = vmul.f32 %v55, %v86
    %v91 = vmul.f32 %v54, %v89
    %v92 = vadd.f32 %v90, %v91
    %s93 = sadd.s32 0, 3
    %s94 = scalar_lea.vmem [#allocation3], %s93
    %v95 = vld [vmem:[%s94] sm:$0x1]
    %v96 = vmul.f32 %v55, %v92
    %v97 = vmul.f32 %v54, %v95
    %v98 = vadd.f32 %v96, %v97
    %s99 = sadd.s32 0, 4
    %s100 = scalar_lea.vmem [#allocation3], %s99
    %v101 = vld [vmem:[%s100] sm:$0x1]
    %v102 = vmul.f32 %v55, %v98
    %v103 = vmul.f32 %v54, %v101
    %v104 = vadd.f32 %v102, %v103
    %s105 = sadd.s32 0, 5
    %s106 = scalar_lea.vmem [#allocation3], %s105
    %v107 = vld [vmem:[%s106] sm:$0x1]
    %v108 = vmul.f32 %v55, %v104
    %v109 = vmul.f32 %v54, %v107
    %v110 = vadd.f32 %v108, %v109
    %s111 = sadd.s32 0, 6
    %s112 = scalar_lea.vmem [#allocation3], %s111
    %v113 = vld [vmem:[%s112] sm:$0x1]
    %v114 = vmul.f32 %v55, %v110
    %v115 = vmul.f32 %v54, %v113
    %v116 = vadd.f32 %v114, %v115
    %s117 = sadd.s32 0, 7
    %s118 = scalar_lea.vmem [#allocation3], %s117
    %v119 = vld [vmem:[%s118] sm:$0x1]
    %v120 = vmul.f32 %v55, %v116
    %v121 = vmul.f32 %v54, %v119
    %v122 = vadd.f32 %v120, %v121
    %v124 = vrot.slane %v83, 7
    %v127 = vrot.slane %v89, 6
    %v130 = vrot.slane %v95, 5
    %v133 = vrot.slane %v101, 4
    %v136 = vrot.slane %v107, 3
    %v139 = vrot.slane %v113, 2
    %v142 = vrot.slane %v119, 1
    %vm144 = vcmask 1040384
    %v145 = vsel %vm144, %v77, %v124
    %vm146 = vcmask 1041408
    %v147 = vsel %vm146, %v145, %v127
    %vm148 = vcmask 1042432
    %v149 = vsel %vm148, %v147, %v130
    %vm150 = vcmask 1043456
    %v151 = vsel %vm150, %v149, %v133
    %vm152 = vcmask 1044480
    %v153 = vsel %vm152, %v151, %v136
    %vm154 = vcmask 1045504
    %v155 = vsel %vm154, %v153, %v139
    %vm156 = vcmask 1046528
    %v157 = vsel %vm156, %v155, %v142
    %v159 = vrot.slane %v86, 7
    %v162 = vrot.slane %v92, 6
    %v165 = vrot.slane %v98, 5
    %v168 = vrot.slane %v104, 4
    %v171 = vrot.slane %v110, 3
    %v174 = vrot.slane %v116, 2
    %v177 = vrot.slane %v122, 1
    %v179 = vsel %vm144, %v80, %v159
    %v180 = vsel %vm146, %v179, %v162
    %v181 = vsel %vm148, %v180, %v165
    %v182 = vsel %vm150, %v181, %v168
    %v183 = vsel %vm152, %v182, %v171
    %v184 = vsel %vm154, %v183, %v174
    %v185 = vsel %vm156, %v184, %v177
    %v186 = vadd.f32 %v185, 1e-06
    %v187 = vpow.f32 %v186, %v60
    %v188 = vmul.f32 %v157, %v187
    %v189 = vadd.f32 %v188, %v65
    %v190 = vpow.f32 %v189, %v70
    %v191 = vsub.f32 %v190, %v75
    %192 = vst [vmem:[#allocation2] sm:$0xff] %v191
    %s193 = scalar_lea.vmem [#allocation3], 8
    %v194 = vld [vmem:[%s193] sm:$0x1]
    %v195 = vmul.f32 %v55, %v122
    %v196 = vmul.f32 %v54, %v194
    %v197 = vadd.f32 %v195, %v196
    %s198 = sadd.s32 8, 1
    %s199 = scalar_lea.vmem [#allocation3], %s198
    %v200 = vld [vmem:[%s199] sm:$0x1]
    %v201 = vmul.f32 %v55, %v197
    %v202 = vmul.f32 %v54, %v200
    %v203 = vadd.f32 %v201, %v202
    %s204 = sadd.s32 8, 2
    %s205 = scalar_lea.vmem [#allocation3], %s204
    %v206 = vld [vmem:[%s205] sm:$0x1]
    %v207 = vmul.f32 %v55, %v203
    %v208 = vmul.f32 %v54, %v206
    %v209 = vadd.f32 %v207, %v208
    %s210 = sadd.s32 8, 3
    %s211 = scalar_lea.vmem [#allocation3], %s210
    %v212 = vld [vmem:[%s211] sm:$0x1]
    %v213 = vmul.f32 %v55, %v209
    %v214 = vmul.f32 %v54, %v212
    %v215 = vadd.f32 %v213, %v214
    %s216 = sadd.s32 8, 4
    %s217 = scalar_lea.vmem [#allocation3], %s216
    %v218 = vld [vmem:[%s217] sm:$0x1]
    %v219 = vmul.f32 %v55, %v215
    %v220 = vmul.f32 %v54, %v218
    %v221 = vadd.f32 %v219, %v220
    %s222 = sadd.s32 8, 5
    %s223 = scalar_lea.vmem [#allocation3], %s222
    %v224 = vld [vmem:[%s223] sm:$0x1]
    %v225 = vmul.f32 %v55, %v221
    %v226 = vmul.f32 %v54, %v224
    %v227 = vadd.f32 %v225, %v226
    %s228 = sadd.s32 8, 6
    %s229 = scalar_lea.vmem [#allocation3], %s228
    %v230 = vld [vmem:[%s229] sm:$0x1]
    %v231 = vmul.f32 %v55, %v227
    %v232 = vmul.f32 %v54, %v230
    %v233 = vadd.f32 %v231, %v232
    %s234 = sadd.s32 8, 7
    %s235 = scalar_lea.vmem [#allocation3], %s234
    %v236 = vld [vmem:[%s235] sm:$0x1]
    %v237 = vmul.f32 %v55, %v233
    %v238 = vmul.f32 %v54, %v236
    %v239 = vadd.f32 %v237, %v238
    %v241 = vrot.slane %v200, 7
    %v244 = vrot.slane %v206, 6
    %v247 = vrot.slane %v212, 5
    %v250 = vrot.slane %v218, 4
    %v253 = vrot.slane %v224, 3
    %v256 = vrot.slane %v230, 2
    %v259 = vrot.slane %v236, 1
    %v261 = vsel %vm144, %v194, %v241
    %v262 = vsel %vm146, %v261, %v244
    %v263 = vsel %vm148, %v262, %v247
    %v264 = vsel %vm150, %v263, %v250
    %v265 = vsel %vm152, %v264, %v253
    %v266 = vsel %vm154, %v265, %v256
    %v267 = vsel %vm156, %v266, %v259
    %v269 = vrot.slane %v203, 7
    %v272 = vrot.slane %v209, 6
    %v275 = vrot.slane %v215, 5
    %v278 = vrot.slane %v221, 4
    %v281 = vrot.slane %v227, 3
    %v284 = vrot.slane %v233, 2
    %v287 = vrot.slane %v239, 1
    %v289 = vsel %vm144, %v197, %v269
    %v290 = vsel %vm146, %v289, %v272
    %v291 = vsel %vm148, %v290, %v275
    %v292 = vsel %vm150, %v291, %v278
    %v293 = vsel %vm152, %v292, %v281
    %v294 = vsel %vm154, %v293, %v284
    %v295 = vsel %vm156, %v294, %v287
    %v296 = vadd.f32 %v295, 1e-06
    %v297 = vpow.f32 %v296, %v60
    %v298 = vmul.f32 %v267, %v297
    %v299 = vadd.f32 %v298, %v65
    %v300 = vpow.f32 %v299, %v70
    %v301 = vsub.f32 %v300, %v75
    %s302 = scalar_lea.vmem [#allocation2], 8
    %303 = vst [vmem:[%s302] sm:$0xff] %v301
    %v304 = vld [vmem:[#allocation2] sm:$0xff]
    %v305 = vld [vmem:[#allocation2 + $0x8] sm:$0xff]
    %v306 = vld [vmem:[#allocation8] sm:$0xff]
    %v307 = vld [vmem:[#allocation8 + $0x8] sm:$0xff]
    %v308 = vld [vmem:[#allocation8 + $0x10] sm:$0xff]
    %v309 = vld [vmem:[#allocation8 + $0x18] sm:$0xff]
    %v310 = vld [vmem:[#allocation8 + $0x20] sm:$0xff]
    %v311 = vld [vmem:[#allocation8 + $0x28] sm:$0xff]
    %v312 = vld [vmem:[#allocation8 + $0x30] sm:$0xff]
    %v313 = vld [vmem:[#allocation8 + $0x38] sm:$0xff]
    %v314 = vld [vmem:[#allocation8 + $0x40] sm:$0xff]
    %v315 = vld [vmem:[#allocation8 + $0x48] sm:$0xff]
    %v316 = vld [vmem:[#allocation8 + $0x50] sm:$0xff]
    %v317 = vld [vmem:[#allocation8 + $0x58] sm:$0xff]
    %v318 = vld [vmem:[#allocation8 + $0x60] sm:$0xff]
    %v319 = vld [vmem:[#allocation8 + $0x68] sm:$0xff]
    %v320 = vld [vmem:[#allocation8 + $0x70] sm:$0xff]
    %v321 = vld [vmem:[#allocation8 + $0x78] sm:$0xff]
    %322 = vmatprep.subr.mxu0 0.0
    %323 = vmatpush1.msra.mxu0 %v306
    %324 = vmatprep.subr.mxu0 0.0
    %325 = vmatpush1.msra.mxu0 %v307
    %326 = vmatprep.subr.mxu0 0.0
    %327 = vmatpush1.msra.mxu0 %v308
    %328 = vmatprep.subr.mxu0 0.0
    %329 = vmatpush1.msra.mxu0 %v309
    %330 = vmatprep.subr.mxu0 0.0
    %331 = vmatpush1.msra.mxu0 %v310
    %332 = vmatprep.subr.mxu0 0.0
    %333 = vmatpush1.msra.mxu0 %v311
    %334 = vmatprep.subr.mxu0 0.0
    %335 = vmatpush1.msra.mxu0 %v312
    %336 = vmatprep.subr.mxu0 0.0
    %337 = vmatpush1.msra.mxu0 %v313
    %338 = vmatprep.subr.mxu0 0.0
    %339 = vmatpush1.msra.mxu0 %v314
    %340 = vmatprep.subr.mxu0 0.0
    %341 = vmatpush1.msra.mxu0 %v315
    %342 = vmatprep.subr.mxu0 0.0
    %343 = vmatpush1.msra.mxu0 %v316
    %344 = vmatprep.subr.mxu0 0.0
    %345 = vmatpush1.msra.mxu0 %v317
    %346 = vmatprep.subr.mxu0 0.0
    %347 = vmatpush1.msra.mxu0 %v318
    %348 = vmatprep.subr.mxu0 0.0
    %349 = vmatpush1.msra.mxu0 %v319
    %350 = vmatprep.subr.mxu0 0.0
    %351 = vmatpush1.msra.mxu0 %v320
    %352 = vmatprep.subr.mxu0 0.0
    %353 = vmatpush1.msra.mxu0 %v321
    %354 = vmatprep.subr.mxu0 0.0
    %355 = vmatpush1.msra.mxu0 0.0
    %356 = vmatprep.subr.mxu0 0.0
    %357 = vmatpush1.msra.mxu0 0.0
    %358 = vmatprep.subr.mxu0 0.0
    %359 = vmatpush1.msra.mxu0 0.0
    %360 = vmatprep.subr.mxu0 0.0
    %361 = vmatpush1.msra.mxu0 0.0
    %362 = vmatprep.subr.mxu0 0.0
    %363 = vmatpush1.msra.mxu0 0.0
    %364 = vmatprep.subr.mxu0 0.0
    %365 = vmatpush1.msra.mxu0 0.0
    %366 = vmatprep.subr.mxu0 0.0
    %367 = vmatpush1.msra.mxu0 0.0
    %368 = vmatprep.subr.mxu0 0.0
    %369 = vmatpush1.msra.mxu0 0.0
    %370 = vmatprep.subr.mxu0 0.0
    %371 = vmatpush1.msra.mxu0 0.0
    %372 = vmatprep.subr.mxu0 0.0
    %373 = vmatpush1.msra.mxu0 0.0
    %374 = vmatprep.subr.mxu0 0.0
    %375 = vmatpush1.msra.mxu0 0.0
    %376 = vmatprep.subr.mxu0 0.0
    %377 = vmatpush1.msra.mxu0 0.0
    %378 = vmatprep.subr.mxu0 0.0
    %379 = vmatpush1.msra.mxu0 0.0
    %380 = vmatprep.subr.mxu0 0.0
    %381 = vmatpush1.msra.mxu0 0.0
    %382 = vmatprep.subr.mxu0 0.0
    %383 = vmatpush1.msra.mxu0 0.0
    %384 = vmatprep.subr.mxu0 0.0
    %385 = vmatpush1.msra.mxu0 0.0
    %386 = vmatprep.mubr.f32.mxu0 0.0
    %387 = vmatmul.mubr.f32.gmra.mrb[0].mxu0 %v304
    %v388 = vpop.f32.mrb[0].mxu0
    %v389 = vadd.f32 0.0, %v388
    %v390 = vpop.f32.mrb[0].mxu0
    %391 = vmatprep.mubr.f32.mxu0 0.0
    %392 = vmatmul.mubr.f32.gmra.mrb[0].mxu0 %v305
    %v393 = vpop.f32.mrb[0].mxu0
    %v394 = vadd.f32 0.0, %v393
    %v395 = vpop.f32.mrb[0].mxu0
    %396 = vdwg.mxu0
    %397 = vst [vmem:[#allocation9] sm:$0xff] %v389
    %398 = vst [vmem:[#allocation9 + $0x8] sm:$0xff] %v394
    // Predicated region
    $region26: #{tpu_custom_call.1} parent=1 // pred_check
      _
    $region27: #{tpu_custom_call.1} parent=1 // pred_check_branch
      %400 = sbr.rel (0) target = $region29
    $region28: #{tpu_custom_call.1} parent=1 // pred_region
      %s402 = ssub.s32 256, 256
      %403 = vsyncadd [#allocation5], %s402
      %s404 = sshll.u32 [#allocation9], 4
      %s405 = int_to_ptr.vmem [resolvable:$true] %s404
      %410 = dma.vmem_to_hbm [thread:$0]  %s405, 256, %s3, [#allocation5], 128, 128, 8
    $region29: #{tpu_custom_call.1} parent=1 // pred_fallthru
      _
    // Predicated region
    $region30: #{tpu_custom_call.1} parent=1 // pred_check
      _
    $region31: #{tpu_custom_call.1} parent=1 // pred_check_branch
      %412 = sbr.rel (0) target = $region33
    $region32: #{tpu_custom_call.1} parent=1 // pred_region
      %413 = dma.done [#allocation5], 256
    $region33: #{tpu_custom_call.1} parent=1 // pred_fallthru
      _
    %414 = vsyncpa [#allocation4], 1
    %415 = vsyncpa [#allocation7], 1
    %416 = vsyncpa [#allocation5], 1

</llo_original>
